<compile_context>
chip_gen: v5e
topology: v5e:2x2
jax: 0.10.0
libtpu: 0.0.40
codegen_flags: <defaults>
</compile_context>

<pallas_src>
import functools

import jax
import jax.numpy as jnp
from jax import lax
from jax.experimental import pallas as pl
from jax.experimental.pallas import tpu as pltpu

_LANES = 128
_SUBLANES = 8


def _focal_loss_kernel(x_ref, t_ref, o_ref, *, gamma, tile_rows, needs_mask,
                       rows_full_last, rem_lanes, binary_target,
                       use_sigmoid_sq):
    x = x_ref[...].astype(jnp.float32)
    t = t_ref[...].astype(jnp.float32)

    # Stable BCE-with-logits:
    #   x - x*t + max(-x,0) + log(exp(-max_val) + exp(-x-max_val))
    #     == max(x,0) - x*t + log1p(exp(-|x|))
    abs_x = jnp.abs(x)
    exp_neg_abs_x = jnp.exp(-abs_x)
    softplus_neg_abs_x = jnp.log1p(exp_neg_abs_x)
    bce = jnp.maximum(x, 0.0) - x * t + softplus_neg_abs_x

    # z = -x * (2t - 1);  invprobs = logsigmoid(z)
    z = -x * (t * 2.0 - 1.0)
    if binary_target:
        # t in {0,1}  =>  |z| == |x| exactly; reuse exp/log1p from above.
        exp_neg_abs_z = exp_neg_abs_x
    else:
        exp_neg_abs_z = jnp.exp(-jnp.abs(z))

    if use_sigmoid_sq:
        # gamma == 2: exp(2*logsigmoid(z)) == sigmoid(z)^2.  Stable sigmoid
        # from exp(-|z|) + approx reciprocal (EUP vrcp, ~free slot).
        recip = pl.reciprocal(1.0 + exp_neg_abs_z, approx=True)
        sig = jnp.where(z >= 0.0, recip, exp_neg_abs_z * recip)
        modulator = sig * sig
    else:
        softplus_neg_abs_z = (softplus_neg_abs_x if binary_target
                              else jnp.log1p(exp_neg_abs_z))
        log_sig = jnp.minimum(z, 0.0) - softplus_neg_abs_z  # logsigmoid(z)
        modulator = jnp.exp(log_sig * gamma)

    loss = modulator * bce

    def _store(vals):
        psum = jnp.sum(
            vals.reshape(tile_rows // _SUBLANES, _SUBLANES, _LANES), axis=0)
        o_ref[...] = psum.reshape(1, _SUBLANES, _LANES)

    if needs_mask:
        # Only the last grid step can see padded lanes / out-of-bounds rows.
        is_last = pl.program_id(0) == pl.num_programs(0) - 1

        @pl.when(is_last)
        def _():
            row = lax.broadcasted_iota(jnp.int32, (tile_rows, _LANES), 0)
            lane = lax.broadcasted_iota(jnp.int32, (tile_rows, _LANES), 1)
            # Static (Python int) thresholds local to the last tile -> no
            # program_id arithmetic, no int32 overflow for huge inputs.
            valid = (row < rows_full_last) | (
                (row == rows_full_last) & (lane < rem_lanes))
            _store(jnp.where(valid, loss, 0.0))

        @pl.when(jnp.logical_not(is_last))
        def _():
            _store(loss)
    else:
        _store(loss)


def _row_multiple(dtype):
    """Sublane multiple for native-dtype blocks: 8 (4B), 16 (2B), 32 (1B)."""
    itemsize = jnp.dtype(dtype).itemsize
    return max(_SUBLANES, _SUBLANES * (4 // max(1, itemsize)))


def focal_loss(inp, target, gamma, average=True, *, binary_target=False,
               approx_modulator=False, tile_rows=2048):
    if inp.shape != target.shape:
        raise ValueError(
            "Target size ({}) must be the same as input size ({})".format(
                target.shape, inp.shape))

    # Bool targets: keep 1 byte/elem but use a plain integer layout.
    if target.dtype == jnp.bool_:
        target = target.astype(jnp.int8)

    n_total = inp.size
    m = pl.cdiv(n_total, _LANES)                   # rows of the (m, 128) view
    n_full_rows, n_rem = divmod(n_total, _LANES)

    # Tile sizing: multiple of the packing-aware sublane count of both dtypes;
    # shrink for tiny inputs, otherwise keep the big default tile.
    row_mult = max(_row_multiple(inp.dtype), _row_multiple(target.dtype))
    tile_rows = pl.cdiv(tile_rows, row_mult) * row_mult
    tile_rows = min(tile_rows, pl.cdiv(m, row_mult) * row_mult)
    tile_rows = max(tile_rows, row_mult)
    num_tiles = pl.cdiv(m, tile_rows)
    needs_mask = (num_tiles * tile_rows * _LANES) != n_total

    # Pad only to a 128-lane multiple (zero copy when already aligned); the
    # partial last *block* is handled by Pallas OOB reads + the in-kernel mask.
    pad = m * _LANES - n_total
    x_flat = inp.reshape(-1)
    t_flat = target.reshape(-1)
    if pad:
        x_flat = jnp.pad(x_flat, (0, pad))
        t_flat = jnp.pad(t_flat, (0, pad))
    x2d = x_flat.reshape(m, _LANES)
    t2d = t_flat.reshape(m, _LANES)

    use_sigmoid_sq = bool(approx_modulator) and float(gamma) == 2.0

    kernel = functools.partial(
        _focal_loss_kernel,
        gamma=float(gamma),
        tile_rows=tile_rows,
        needs_mask=needs_mask,
        rows_full_last=n_full_rows - (num_tiles - 1) * tile_rows,
        rem_lanes=n_rem,
        binary_target=bool(binary_target),
        use_sigmoid_sq=use_sigmoid_sq,
    )

    # Transcendentals per element for the chosen path.
    n_trans = 2                                   # exp(-|x|), log1p
    if not binary_target:
        n_trans += 1                              # exp(-|z|)
    if not use_sigmoid_sq:
        n_trans += 1 + (0 if binary_target else 1)  # exp(gamma*logsig), log1p
    cost = pl.CostEstimate(
        flops=14 * n_total,
        transcendentals=n_trans * n_total,
        bytes_accessed=n_total * (inp.dtype.itemsize + target.dtype.itemsize)
        + num_tiles * _SUBLANES * _LANES * 4,
    )

    partials = pl.pallas_call(
        kernel,
        out_shape=jax.ShapeDtypeStruct((num_tiles, _SUBLANES, _LANES),
                                       jnp.float32),
        grid_spec=pltpu.PrefetchScalarGridSpec(
            num_scalar_prefetch=0,
            grid=(num_tiles,),
            in_specs=[
                # TODO(synk): on v5e, if a trace shows exposed DMA with the
                # bigger tiles, add pipeline_mode=pl.Buffered(3) to these.
                pl.BlockSpec((tile_rows, _LANES), lambda i: (i, 0)),
                pl.BlockSpec((tile_rows, _LANES), lambda i: (i, 0)),
            ],
            out_specs=pl.BlockSpec((1, _SUBLANES, _LANES),
                                   lambda i: (i, 0, 0)),
        ),
        compiler_params=pltpu.CompilerParams(
            # No cross-iteration carry -> grid shards across v7x's 2 TCs.
            dimension_semantics=("parallel",),
        ),
        cost_estimate=cost,
    )(x2d, t2d)

    total = jnp.sum(partials)                     # tiny (num_tiles, 8, 128)
    if average:
        total = total / jnp.float32(n_total)
    return total


def focal_loss_ref(inp, target, gamma, average=True):
    """Pure-JAX reference replicating the PyTorch forward exactly."""
    x = inp.astype(jnp.float32)
    t = target.astype(jnp.float32)
    max_val = jnp.maximum(-x, 0.0)
    loss = x - x * t + max_val + jnp.log(jnp.exp(-max_val) + jnp.exp(-x - max_val))
    invprobs = jax.nn.log_sigmoid(-x * (t * 2.0 - 1.0))
    loss = jnp.exp(invprobs * gamma) * loss
    return jnp.mean(loss) if average else jnp.sum(loss)


if __name__ == "__main__":
    key = jax.random.PRNGKey(0)
    k1, k2 = jax.random.split(key)

    # Small NCHW-style logits/targets: batch=2, channels=4, spatial=16x16.
    x = jax.random.normal(k1, (2, 4, 16, 16), dtype=jnp.float32)
    tgt = (jax.random.uniform(k2, (2, 4, 16, 16)) > 0.5).astype(jnp.float32)
    gamma = 2.0

    # Exact (default) path: mean and sum.
    out_mean = jax.block_until_ready(focal_loss(x, tgt, gamma, average=True))
    ref_mean = focal_loss_ref(x, tgt, gamma, average=True)
    assert jnp.allclose(out_mean, ref_mean, atol=1e-5, rtol=1e-5), (out_mean, ref_mean)

    out_sum = jax.block_until_ready(focal_loss(x, tgt, gamma, average=False))
    ref_sum = focal_loss_ref(x, tgt, gamma, average=False)
    assert jnp.allclose(out_sum, ref_sum, atol=1e-3, rtol=1e-5), (out_sum, ref_sum)

    # Non-lane-aligned shape: exercises the lane pad + last-tile mask path.
    k3, k4 = jax.random.split(k1)
    x2 = jax.random.normal(k3, (3, 5, 7, 11), dtype=jnp.float32)
    t2 = (jax.random.uniform(k4, (3, 5, 7, 11)) > 0.5).astype(jnp.float32)
    out2 = jax.block_until_ready(focal_loss(x2, t2, gamma, average=True))
    ref2 = focal_loss_ref(x2, t2, gamma, average=True)
    assert jnp.allclose(out2, ref2, atol=1e-5, rtol=1e-5), (out2, ref2)

    # bf16 logits passed natively + binary-target fast path (exact math for
    # t in {0,1}; fewer transcendentals, half the logits HBM traffic).
    xb = x.astype(jnp.bfloat16)
    out_b = jax.block_until_ready(
        focal_loss(xb, tgt, gamma, average=True, binary_target=True))
    ref_b = focal_loss_ref(xb.astype(jnp.float32), tgt, gamma, average=True)
    assert jnp.allclose(out_b, ref_b, atol=1e-5, rtol=1e-5), (out_b, ref_b)

    # gamma == 2 approx-modulator fast path (sigmoid^2 via approx reciprocal):
    # small relative drift vs the exact formula is expected.
    out_f = jax.block_until_ready(
        focal_loss(x, tgt, gamma, average=True, binary_target=True,
                   approx_modulator=True))
    assert jnp.allclose(out_f, ref_mean, atol=1e-3, rtol=1e-2), (out_f, ref_mean)

    print("KERNEL_OK")
</pallas_src>

<mosaic_0001>
module attributes {stable_mosaic.version = 11 : i64} {
  func.func @_focal_loss_kernel(%arg0: i32, %arg1: memref<16x128xf32, #tpu.memory_space<vmem>>, %arg2: memref<16x128xf32, #tpu.memory_space<vmem>>, %arg3: memref<1x8x128xf32, #tpu.memory_space<vmem>>) attributes {dimension_semantics = [#tpu.dimension_semantics<parallel>], iteration_bounds = array<i64: 1>, scalar_prefetch = 0 : i64, scratch_operands = 0 : i64, tpu.core_type = #tpu.core_type<tc>, window_params = [{transform_indices = @transform_0, window_bounds = array<i64: 16, 128>}, {transform_indices = @transform_1, window_bounds = array<i64: 16, 128>}, {transform_indices = @transform_2, window_bounds = array<i64: 1, 8, 128>}]} {
    %c0 = arith.constant 0 : index
    %c0_0 = arith.constant 0 : index
    %0 = vector.load %arg1[%c0, %c0_0] : memref<16x128xf32, #tpu.memory_space<vmem>>, vector<16x128xf32>
    %c0_1 = arith.constant 0 : index
    %c0_2 = arith.constant 0 : index
    %1 = vector.load %arg2[%c0_1, %c0_2] : memref<16x128xf32, #tpu.memory_space<vmem>>, vector<16x128xf32>
    %2 = math.absf %0 : vector<16x128xf32>
    %cst = arith.constant 0.000000e+00 : f32
    %3 = vector.broadcast %cst : f32 to vector<16x128xf32>
    %4 = arith.subf %3, %2 : vector<16x128xf32>
    %5 = math.exp %4 : vector<16x128xf32>
    %6 = math.log1p %5 : vector<16x128xf32>
    %cst_3 = arith.constant 0.000000e+00 : f32
    %7 = vector.broadcast %cst_3 : f32 to vector<16x128xf32>
    %8 = arith.maximumf %0, %7 : vector<16x128xf32>
    %9 = arith.mulf %0, %1 : vector<16x128xf32>
    %10 = arith.subf %8, %9 : vector<16x128xf32>
    %11 = arith.addf %10, %6 : vector<16x128xf32>
    %cst_4 = arith.constant 0.000000e+00 : f32
    %12 = vector.broadcast %cst_4 : f32 to vector<16x128xf32>
    %13 = arith.subf %12, %0 : vector<16x128xf32>
    %cst_5 = arith.constant 2.000000e+00 : f32
    %14 = vector.broadcast %cst_5 : f32 to vector<16x128xf32>
    %15 = arith.mulf %1, %14 : vector<16x128xf32>
    %cst_6 = arith.constant 1.000000e+00 : f32
    %16 = vector.broadcast %cst_6 : f32 to vector<16x128xf32>
    %17 = arith.subf %15, %16 : vector<16x128xf32>
    %18 = arith.mulf %13, %17 : vector<16x128xf32>
    %19 = math.absf %18 : vector<16x128xf32>
    %cst_7 = arith.constant 0.000000e+00 : f32
    %20 = vector.broadcast %cst_7 : f32 to vector<16x128xf32>
    %21 = arith.subf %20, %19 : vector<16x128xf32>
    %22 = math.exp %21 : vector<16x128xf32>
    %23 = math.log1p %22 : vector<16x128xf32>
    %cst_8 = arith.constant 0.000000e+00 : f32
    %24 = vector.broadcast %cst_8 : f32 to vector<16x128xf32>
    %25 = arith.minimumf %18, %24 : vector<16x128xf32>
    %26 = arith.subf %25, %23 : vector<16x128xf32>
    %cst_9 = arith.constant 2.000000e+00 : f32
    %27 = vector.broadcast %cst_9 : f32 to vector<16x128xf32>
    %28 = arith.mulf %26, %27 : vector<16x128xf32>
    %29 = math.exp %28 : vector<16x128xf32>
    %30 = arith.mulf %29, %11 : vector<16x128xf32>
    %31 = vector.shape_cast %30 : vector<16x128xf32> to vector<2x8x128xf32>
    %cst_10 = arith.constant dense<0.000000e+00> : vector<8x128xf32>
    %32 = vector.multi_reduction <add>, %31, %cst_10 [0] : vector<2x8x128xf32> to vector<8x128xf32>
    %33 = vector.shape_cast %32 : vector<8x128xf32> to vector<1x8x128xf32>
    %c0_11 = arith.constant 0 : index
    %c0_12 = arith.constant 0 : index
    %c0_13 = arith.constant 0 : index
    %34 = vector.load %arg3[%c0_11, %c0_12, %c0_13] : memref<1x8x128xf32, #tpu.memory_space<vmem>>, vector<1x8x128xf32>
    tpu.vector_store %arg3[%c0_11, %c0_12, %c0_13], %33 {strides = array<i32>} : memref<1x8x128xf32, #tpu.memory_space<vmem>>, vector<1x8x128xf32>,
    return
  }
  func.func @transform_0(%arg0: i32) -> (i32, i32) {
    %c0_i32 = arith.constant 0 : i32
    %c0_i32_0 = arith.constant 0 : i32
    return %arg0, %c0_i32 : i32, i32
  }
  func.func @transform_1(%arg0: i32) -> (i32, i32) {
    %c0_i32 = arith.constant 0 : i32
    %c0_i32_0 = arith.constant 0 : i32
    return %arg0, %c0_i32 : i32, i32
  }
  func.func @transform_2(%arg0: i32) -> (i32, i32, i32) {
    %c0_i32 = arith.constant 0 : i32
    %c0_i32_0 = arith.constant 0 : i32
    %c0_i32_1 = arith.constant 0 : i32
    return %arg0, %c0_i32, %c0_i32_0 : i32, i32, i32
  }
}

</mosaic_0001>

<llo_original>
// kernel: tpu_custom_call.1
$region0: #{tpu_custom_call.1}
  #allocation0 [shape = 'u32[]', space=smem, size = 0x4, offset = 0x4, fixed_abs, tag = 'smem constant byte address 0x4 - core index']
  #allocation1 [shape = 'u32[72,128]{1,0:T(1,128)}', space=vmem, size = 0x9000, scoped, tag = 'internal scratch']
  %s0 = inlined_call_operand.hbm [shape: f32[16,128], index: 0, kind: input, shape index: {}]
  %s1 = inlined_call_operand.hbm [shape: f32[16,128], index: 1, kind: input, shape index: {}]
  %s2 = inlined_call_operand.hbm [shape: f32[1,8,128], index: 2, kind: output, shape index: {}]
  %s3 = sld [smem:[#allocation0]]
  $region26: #{tpu_custom_call.1} parent=0
    _
  %s5 = ssub.s32 1, %s3
  %s6 = scalar_select 0, %s5, %s3
  $region1: #{tpu_custom_call.1} parent=0
    #allocation2 [shape = 'u8[8192]{0}', space=vmem, size = 0x2000, scoped, tag = 'input window, operand 0, single buffered']
    #allocation3 [shape = 's32[1]{0}', space=sflag, size = 0x4, scoped, tag = 'scoped memory for tpu_custom_call.1']
    #allocation4 [shape = 's32[1]{0}', space=sflag, size = 0x4, scoped, tag = 'scoped memory for tpu_custom_call.1']
    #allocation5 [shape = 'u8[8192]{0}', space=vmem, size = 0x2000, scoped, tag = 'input window, operand 1, single buffered']
    #allocation6 [shape = 's32[1]{0}', space=sflag, size = 0x4, scoped, tag = 'scoped memory for tpu_custom_call.1']
    #allocation7 [shape = 'u8[4096]{0}', space=vmem, size = 0x1000, scoped, tag = 'output window, operand 0, single buffered']
    %7 = vsyncpa [#allocation3], 0
    %8 = vsyncpa [#allocation6], 0
    %9 = vsyncpa [#allocation4], 0
    // Predicated region
    $region2: #{tpu_custom_call.1} parent=1 // pred_check
      _
    $region3: #{tpu_custom_call.1} parent=1 // pred_check_branch
      %11 = sbr.rel (0) target = $region5
    $region4: #{tpu_custom_call.1} parent=1 // pred_region
      %13 = vsyncadd [#allocation3], 0
      %s14 = sshll.u32 %s0, 4
      %s15 = int_to_ptr.hbm [resolvable:$true] %s14
      %s16 = sshll.u32 [#allocation2], 4
      %s17 = int_to_ptr.vmem [resolvable:$true] %s16
      %22 = dma.hbm_to_vmem [thread:$0]  %s15, 256, %s17, [#allocation3], 128, 128, 8
    $region5: #{tpu_custom_call.1} parent=1 // pred_fallthru
      _
    // Predicated region
    $region6: #{tpu_custom_call.1} parent=1 // pred_check
      _
    $region7: #{tpu_custom_call.1} parent=1 // pred_check_branch
      %24 = sbr.rel (0) target = $region9
    $region8: #{tpu_custom_call.1} parent=1 // pred_region
      %26 = vsyncadd [#allocation6], 0
      %s27 = sshll.u32 %s1, 4
      %s28 = int_to_ptr.hbm [resolvable:$true] %s27
      %s29 = sshll.u32 [#allocation5], 4
      %s30 = int_to_ptr.vmem [resolvable:$true] %s29
      %35 = dma.hbm_to_vmem [thread:$0]  %s28, 256, %s30, [#allocation6], 128, 128, 8
    $region9: #{tpu_custom_call.1} parent=1 // pred_fallthru
      _
    // Predicated region
    $region10: #{tpu_custom_call.1} parent=1 // pred_check
      _
    $region11: #{tpu_custom_call.1} parent=1 // pred_check_branch
      %37 = sbr.rel (0) target = $region13
    $region12: #{tpu_custom_call.1} parent=1 // pred_region
      %39 = dma.done [#allocation3], 256
    $region13: #{tpu_custom_call.1} parent=1 // pred_fallthru
      _
    // Predicated region
    $region14: #{tpu_custom_call.1} parent=1 // pred_check
      _
    $region15: #{tpu_custom_call.1} parent=1 // pred_check_branch
      %41 = sbr.rel (0) target = $region17
    $region16: #{tpu_custom_call.1} parent=1 // pred_region
      %43 = dma.done [#allocation6], 256
    $region17: #{tpu_custom_call.1} parent=1 // pred_fallthru
      _
    %v44 = vld [vmem:[#allocation2] sm:$0xff]
    %v45 = vld [vmem:[#allocation2 + $0x8] sm:$0xff]
    %v46 = vld [vmem:[#allocation5] sm:$0xff]
    %v47 = vld [vmem:[#allocation5 + $0x8] sm:$0xff]
    %v48 = vand.u32 2147483647, %v44
    %v49 = vand.u32 2147483647, %v45
    %v50 = vsub.f32 0.0, %v48
    %v51 = vsub.f32 0.0, %v49
    %v52 = vmul.f32 %v50, 1.442695
    %v53 = vpow.pop %v52
    %v54 = vmul.f32 %v51, 1.442695
    %v55 = vpow.pop %v54
    %v56 = vadd.f32 %v53, 1.0
    %v57 = vlog2.pop %v56
    %v58 = vmul.f32 %v57, 0.6931472
    %v59 = vmul.f32 -0.5, %v53
    %v60 = vadd.f32 %v59, 1.0
    %v61 = vmul.f32 %v60, %v53
    %v62 = vand.u32 2147483647, %v53
    %vm63 = vcmp.lt.f32.partialorder %v62, 0.0004427343
    %v64 = vsel %vm63, %v61, %v58
    %v65 = vadd.f32 %v55, 1.0
    %v66 = vlog2.pop %v65
    %v67 = vmul.f32 %v66, 0.6931472
    %v68 = vmul.f32 -0.5, %v55
    %v69 = vadd.f32 %v68, 1.0
    %v70 = vmul.f32 %v69, %v55
    %v71 = vand.u32 2147483647, %v55
    %vm72 = vcmp.lt.f32.partialorder %v71, 0.0004427343
    %v73 = vsel %vm72, %v70, %v67
    %v74 = vmax.f32 %v44, 0.0
    %v75 = vmax.f32 %v45, 0.0
    %v76 = vmul.f32 %v44, %v46
    %v77 = vmul.f32 %v45, %v47
    %v78 = vsub.f32 %v74, %v76
    %v79 = vsub.f32 %v75, %v77
    %v80 = vadd.f32 %v78, %v64
    %v81 = vadd.f32 %v79, %v73
    %v82 = vsub.f32 0.0, %v44
    %v83 = vsub.f32 0.0, %v45
    %v84 = vmul.f32 %v46, 2.0
    %v85 = vmul.f32 %v47, 2.0
    %v86 = vsub.f32 %v84, 1.0
    %v87 = vsub.f32 %v85, 1.0
    %v88 = vmul.f32 %v82, %v86
    %v89 = vmul.f32 %v83, %v87
    %v90 = vand.u32 2147483647, %v88
    %v91 = vand.u32 2147483647, %v89
    %v92 = vsub.f32 0.0, %v90
    %v93 = vsub.f32 0.0, %v91
    %v94 = vmul.f32 %v92, 1.442695
    %v95 = vpow.pop %v94
    %v96 = vmul.f32 %v93, 1.442695
    %v97 = vpow.pop %v96
    %v98 = vadd.f32 %v95, 1.0
    %v99 = vlog2.pop %v98
    %v100 = vmul.f32 %v99, 0.6931472
    %v101 = vmul.f32 -0.5, %v95
    %v102 = vadd.f32 %v101, 1.0
    %v103 = vmul.f32 %v102, %v95
    %v104 = vand.u32 2147483647, %v95
    %vm105 = vcmp.lt.f32.partialorder %v104, 0.0004427343
    %v106 = vsel %vm105, %v103, %v100
    %v107 = vadd.f32 %v97, 1.0
    %v108 = vlog2.pop %v107
    %v109 = vmul.f32 %v108, 0.6931472
    %v110 = vmul.f32 -0.5, %v97
    %v111 = vadd.f32 %v110, 1.0
    %v112 = vmul.f32 %v111, %v97
    %v113 = vand.u32 2147483647, %v97
    %vm114 = vcmp.lt.f32.partialorder %v113, 0.0004427343
    %v115 = vsel %vm114, %v112, %v109
    %v116 = vmin.f32 %v88, 0.0
    %v117 = vmin.f32 %v89, 0.0
    %v118 = vsub.f32 %v116, %v106
    %v119 = vsub.f32 %v117, %v115
    %v120 = vmul.f32 %v118, 2.0
    %v121 = vmul.f32 %v119, 2.0
    %v122 = vmul.f32 %v120, 1.442695
    %v123 = vpow.pop %v122
    %v124 = vmul.f32 %v121, 1.442695
    %v125 = vpow.pop %v124
    %v126 = vmul.f32 %v123, %v80
    %v127 = vmul.f32 %v125, %v81
    %v128 = vadd.f32 %v126, %v127
    %129 = vst [vmem:[#allocation7] sm:$0xff] %v128
    // Predicated region
    $region18: #{tpu_custom_call.1} parent=1 // pred_check
      _
    $region19: #{tpu_custom_call.1} parent=1 // pred_check_branch
      %131 = sbr.rel (0) target = $region21
    $region20: #{tpu_custom_call.1} parent=1 // pred_region
      %133 = vsyncadd [#allocation4], 0
      %s135 = sshll.u32 [#allocation7], 4
      %s136 = int_to_ptr.vmem [resolvable:$true] %s135
      %s137 = sshll.u32 %s2, 4
      %s138 = int_to_ptr.hbm [resolvable:$true] %s137
      %140 = dma.vmem_to_hbm [thread:$0]  %s136, 128, %s138, [#allocation4]
    $region21: #{tpu_custom_call.1} parent=1 // pred_fallthru
      _
    // Predicated region
    $region22: #{tpu_custom_call.1} parent=1 // pred_check
      _
    $region23: #{tpu_custom_call.1} parent=1 // pred_check_branch
      %142 = sbr.rel (0) target = $region25
    $region24: #{tpu_custom_call.1} parent=1 // pred_region
      %144 = dma.done [#allocation4], 128
    $region25: #{tpu_custom_call.1} parent=1 // pred_fallthru
      _
    %145 = vsyncpa [#allocation3], 1
    %146 = vsyncpa [#allocation6], 1
    %147 = vsyncpa [#allocation4], 1

</llo_original>
